<compile_context>
chip_gen: v6e
topology: v6e:2x2x1
jax: 0.10.0
libtpu: 0.0.40
codegen_flags: <defaults>
</compile_context>

<pallas_src>
import jax
import jax.numpy as jnp
from jax import lax
from jax.experimental import pallas as pl
from jax.experimental.pallas import tpu as pltpu


_SUBLANE_ALIGN = {4: 8, 2: 16, 1: 32}   # dtype-aware min sublane tile


def _vmem_capacity_bytes():
    try:
        return int(pltpu.get_tpu_info().vmem_capacity_bytes)
    except Exception:  # query unavailable -> assume 128 MiB class
        return 128 << 20


def _largest_divisor_leq(n, cap, step):
    """Largest divisor of n that is <= cap and a multiple of step (0 if none)."""
    best = 0
    d = step
    lim = min(n, cap)
    while d <= lim:
        if n % d == 0:
            best = d
        d += step
    return best


def _choose_c_tile(c, per_channel_bytes, budget, align, min_grid_steps=8):
    """Channel tile: divides C, sublane-aligned, fits `budget`, and keeps the
    grid at >= min_grid_steps steps so DMA/compute overlap and (on megacore
    parts) both TensorCores get work."""
    if c % align != 0 or c < align:
        # Full-dim block is always a legal TPU block shape; only small / odd
        # channel counts reach here on the resident path (feasibility already
        # checked by the caller).
        return c
    by_budget = (budget // per_channel_bytes) // align * align
    by_grid = (c // min_grid_steps) // align * align
    cap = max(align, min(by_budget, by_grid, c))
    best = align
    for t in range(align, cap + 1, align):
        if c % t == 0:
            best = t
    return best


# ----------------------------------------------------------------------------
# Resident-tile path: whole per-channel reduction lives in one VMEM tile.
# ----------------------------------------------------------------------------
def _bn2d_resident_kernel(x_ref, gamma_ref, beta_ref, o_ref):
    # x_ref / o_ref: (B, c_tile, HW) tile in VMEM; gamma/beta: (c_tile, 1).
    b, ct, hw = x_ref.shape
    n = b * hw
    unroll = min(b, 8)

    # Per-channel pivot (first spatial element of batch slab 0): shifted-data
    # variance controls cancellation while keeping a single fused stats pass.
    pivot = x_ref[0, :, 0:1].astype(jnp.float32)               # (ct, 1)

    # Fused pass: per-channel sum and sum-of-squares of (x - pivot),
    # accumulated ELEMENTWISE over batch slabs (VALU only); the cross-lane
    # reduce happens once per statistic at the end (2 XLU pushes per tile).
    def stats_body(i, carry):
        s, s2 = carry
        d = x_ref[i].astype(jnp.float32) - pivot               # (ct, hw)
        return s + d, s2 + d * d

    zeros = jnp.zeros((ct, hw), jnp.float32)
    s, s2 = lax.fori_loop(0, b, stats_body, (zeros, zeros), unroll=unroll)

    sum_d = jnp.sum(s, axis=1, keepdims=True)                  # (ct, 1)
    sumsq_d = jnp.sum(s2, axis=1, keepdims=True)               # (ct, 1)

    nf = jnp.float32(n)
    mean = pivot + sum_d / nf
    # Unbiased variance (ddof=1), NO epsilon — matches torch.Tensor.std.
    var = (sumsq_d - sum_d * sum_d / nf) / jnp.float32(n - 1)

    inv_std = lax.rsqrt(var)                                   # EUP, once/chan
    gamma = gamma_ref[...].astype(jnp.float32)
    beta = beta_ref[...].astype(jnp.float32)
    scale = gamma * inv_std                                    # (ct, 1)
    bias = beta - mean * scale                                 # (ct, 1)

    # Apply: one multiply-add per element, per batch slab.
    def apply_body(i, carry):
        o_ref[i] = (x_ref[i].astype(jnp.float32) * scale + bias).astype(o_ref.dtype)
        return carry

    lax.fori_loop(0, b, apply_body, 0, unroll=unroll)


def _bn2d_resident(x3, gamma, beta, tile_budget, limit_cap, align):
    b, c, hw = x3.shape
    itemsize = jnp.dtype(x3.dtype).itemsize
    per_channel_bytes = b * hw * itemsize

    c_tile = _choose_c_tile(c, per_channel_bytes, tile_budget, align)
    grid = (c // c_tile,)

    tile_bytes = b * c_tile * hw * itemsize
    f32_slab = c_tile * hw * 4
    # double-buffered in+out tiles + f32 accumulators/temps + headroom
    vmem_need = 4 * tile_bytes + 4 * f32_slab + (2 << 20)
    vmem_limit = int(min(limit_cap, max(vmem_need, 32 << 20)))

    return pl.pallas_call(
        _bn2d_resident_kernel,
        out_shape=jax.ShapeDtypeStruct((b, c, hw), x3.dtype),
        grid_spec=pltpu.PrefetchScalarGridSpec(
            num_scalar_prefetch=0,
            grid=grid,
            in_specs=[
                pl.BlockSpec((b, c_tile, hw), lambda i: (0, i, 0)),
                pl.BlockSpec((c_tile, 1), lambda i: (i, 0)),
                pl.BlockSpec((c_tile, 1), lambda i: (i, 0)),
            ],
            out_specs=pl.BlockSpec((b, c_tile, hw), lambda i: (0, i, 0)),
        ),
        compiler_params=pltpu.CompilerParams(
            dimension_semantics=("parallel",),   # channels independent (megacore)
            vmem_limit_bytes=vmem_limit,
        ),
    )(x3, gamma, beta)


# ----------------------------------------------------------------------------
# Fallback path: per-channel working set too big for VMEM — tile H*W as an
# "arbitrary" reduction axis, accumulate sum/sumsq, then a second apply pass.
# ----------------------------------------------------------------------------
def _bn2d_stats_kernel(x_ref, sum_ref, sumsq_ref):
    # x_ref: (B, c_tile, hw_tile); sum/sumsq: (c_tile, 1) resident accumulators.
    b, ct, hwt = x_ref.shape
    unroll = min(b, 8)

    @pl.when(pl.program_id(1) == 0)
    def _():
        sum_ref[...] = jnp.zeros_like(sum_ref)
        sumsq_ref[...] = jnp.zeros_like(sumsq_ref)

    def body(i, carry):
        s, s2 = carry
        xi = x_ref[i].astype(jnp.float32)
        return s + xi, s2 + xi * xi

    zeros = jnp.zeros((ct, hwt), jnp.float32)
    s, s2 = lax.fori_loop(0, b, body, (zeros, zeros), unroll=unroll)
    sum_ref[...] += jnp.sum(s, axis=1, keepdims=True)
    sumsq_ref[...] += jnp.sum(s2, axis=1, keepdims=True)


def _bn2d_apply_kernel(x_ref, scale_ref, bias_ref, o_ref):
    b = x_ref.shape[0]
    scale = scale_ref[...].astype(jnp.float32)
    bias = bias_ref[...].astype(jnp.float32)

    def body(i, carry):
        o_ref[i] = (x_ref[i].astype(jnp.float32) * scale + bias).astype(o_ref.dtype)
        return carry

    lax.fori_loop(0, b, body, 0, unroll=min(b, 8))


def _bn2d_two_pass(x3, gamma, beta, tile_budget, limit_cap, align):
    b, c, hw = x3.shape
    itemsize = jnp.dtype(x3.dtype).itemsize
    n = b * hw

    c_tile = align if (c % align == 0 and c >= align) else c
    max_hwt = max(1, tile_budget // (b * c_tile * itemsize))
    hw_tile = _largest_divisor_leq(hw, max_hwt, step=128)
    if hw_tile == 0:
        # TODO(synk): no 128-multiple divisor of H*W fits the budget -> lane-
        # sparse tiles; restructure upstream for lane density if this is hot.
        hw_tile = _largest_divisor_leq(hw, max_hwt, step=1)
    if hw_tile == 0:
        hw_tile = hw  # TODO(synk): B*c_tile*128 alone overflows the budget.
    grid = (c // c_tile, hw // hw_tile)

    tile_bytes = b * c_tile * hw_tile * itemsize
    acc_bytes = c_tile * hw_tile * 4
    stats_limit = int(min(limit_cap,
                          max(2 * tile_bytes + 4 * acc_bytes + (2 << 20), 32 << 20)))
    apply_limit = int(min(limit_cap,
                          max(4 * tile_bytes + 2 * acc_bytes + (2 << 20), 32 << 20)))

    sums, sumsqs = pl.pallas_call(
        _bn2d_stats_kernel,
        out_shape=(jax.ShapeDtypeStruct((c, 1), jnp.float32),
                   jax.ShapeDtypeStruct((c, 1), jnp.float32)),
        grid_spec=pltpu.PrefetchScalarGridSpec(
            num_scalar_prefetch=0,
            grid=grid,
            in_specs=[pl.BlockSpec((b, c_tile, hw_tile), lambda i, j: (0, i, j))],
            out_specs=(pl.BlockSpec((c_tile, 1), lambda i, j: (i, 0)),
                       pl.BlockSpec((c_tile, 1), lambda i, j: (i, 0))),
        ),
        compiler_params=pltpu.CompilerParams(
            dimension_semantics=("parallel", "arbitrary"),  # reduce over HW last
            vmem_limit_bytes=stats_limit,
        ),
    )(x3)

    # Fold normalize + affine into per-channel scale/bias (C elements; XLA ok).
    # TODO(synk): single-pass sumsq can cancel when |mean| >> std; the resident
    # path uses a per-channel pivot, this path relies on f32 accumulation only.
    nf = jnp.float32(n)
    mean = sums / nf
    var = (sumsqs - sums * sums / nf) / jnp.float32(n - 1)     # unbiased, no eps
    inv_std = lax.rsqrt(var)
    scale = gamma.astype(jnp.float32) * inv_std
    bias = beta.astype(jnp.float32) - mean * scale

    return pl.pallas_call(
        _bn2d_apply_kernel,
        out_shape=jax.ShapeDtypeStruct((b, c, hw), x3.dtype),
        grid_spec=pltpu.PrefetchScalarGridSpec(
            num_scalar_prefetch=0,
            grid=grid,
            in_specs=[
                pl.BlockSpec((b, c_tile, hw_tile), lambda i, j: (0, i, j)),
                pl.BlockSpec((c_tile, 1), lambda i, j: (i, 0)),
                pl.BlockSpec((c_tile, 1), lambda i, j: (i, 0)),
            ],
            out_specs=pl.BlockSpec((b, c_tile, hw_tile), lambda i, j: (0, i, j)),
        ),
        compiler_params=pltpu.CompilerParams(
            dimension_semantics=("parallel", "parallel"),
            vmem_limit_bytes=apply_limit,
        ),
    )(x3, scale, bias)


# ----------------------------------------------------------------------------
# Public wrapper
# ----------------------------------------------------------------------------
def batchnorm2d(x_nchw, gamma, beta, *, tile_budget_bytes=None):
    """x_nchw: (B, C, H, W); gamma, beta: (C, 1). Returns (B, C, H, W)."""
    b, c, h, w = x_nchw.shape
    hw = h * w
    itemsize = jnp.dtype(x_nchw.dtype).itemsize
    align = _SUBLANE_ALIGN.get(itemsize, 8)

    vmem_cap = _vmem_capacity_bytes()
    small_vmem = vmem_cap <= (64 << 20)          # v7x-class: 64 MiB VMEM / core
    if tile_budget_bytes is None:
        tile_budget_bytes = (4 << 20) if small_vmem else (8 << 20)
    limit_cap = (48 << 20) if small_vmem else (96 << 20)

    # Free, contiguous reshape — no HBM round trip (unlike a transpose).
    x3 = x_nchw.reshape(b, c, hw)

    per_channel_bytes = b * hw * itemsize
    min_ct = align if (c % align == 0 and c >= align) else c
    if min_ct * per_channel_bytes <= tile_budget_bytes:
        out3 = _bn2d_resident(x3, gamma, beta, tile_budget_bytes, limit_cap, align)
    else:
        out3 = _bn2d_two_pass(x3, gamma, beta, tile_budget_bytes, limit_cap, align)
    return out3.reshape(b, c, h, w)


if __name__ == "__main__":
    key = jax.random.PRNGKey(0)
    k1, k2, k3 = jax.random.split(key, 3)
    B, C, H, W = 2, 4, 16, 16
    x = jax.random.normal(k1, (B, C, H, W), dtype=jnp.float32)

    def ref_bn(xv, g, be):
        bb, cc, hh, ww = xv.shape
        x_cn = jnp.transpose(xv, (1, 0, 2, 3)).reshape(cc, -1)
        mean = jnp.mean(x_cn, axis=1, keepdims=True)
        std = jnp.std(x_cn, axis=1, ddof=1, keepdims=True)   # unbiased, no eps
        y = (x_cn - mean) / std * g + be
        return jnp.transpose(y.reshape(cc, bb, hh, ww), (1, 0, 2, 3))

    # 1) Resident-tile path with the module's default init (gamma=1, beta=0).
    gamma = jnp.ones((C, 1), dtype=jnp.float32)
    beta = jnp.zeros((C, 1), dtype=jnp.float32)
    out = jax.block_until_ready(batchnorm2d(x, gamma, beta))
    ref = ref_bn(x, gamma, beta)
    assert out.shape == (B, C, H, W)
    assert jnp.allclose(out, ref, atol=1e-4, rtol=1e-4), float(
        jnp.max(jnp.abs(out - ref)))

    # 2) Force the HW-tiled two-kernel fallback (tiny budget) so the large-shape
    #    path is verified too, with nontrivial affine parameters.
    gamma2 = jax.random.normal(k2, (C, 1), dtype=jnp.float32)
    beta2 = jax.random.normal(k3, (C, 1), dtype=jnp.float32)
    out_fb = jax.block_until_ready(
        batchnorm2d(x, gamma2, beta2, tile_budget_bytes=4096))
    ref_fb = ref_bn(x, gamma2, beta2)
    assert jnp.allclose(out_fb, ref_fb, atol=1e-4, rtol=1e-4), float(
        jnp.max(jnp.abs(out_fb - ref_fb)))

    print("KERNEL_OK")
</pallas_src>

<mosaic_0001>
module attributes {stable_mosaic.version = 11 : i64} {
  func.func @_bn2d_resident_kernel(%arg0: i32, %arg1: memref<2x4x256xf32, #tpu.memory_space<vmem>>, %arg2: memref<4x1xf32, #tpu.memory_space<vmem>>, %arg3: memref<4x1xf32, #tpu.memory_space<vmem>>, %arg4: memref<2x4x256xf32, #tpu.memory_space<vmem>>) attributes {dimension_semantics = [#tpu.dimension_semantics<parallel>], iteration_bounds = array<i64: 1>, scalar_prefetch = 0 : i64, scratch_operands = 0 : i64, tpu.core_type = #tpu.core_type<tc>, window_params = [{transform_indices = @transform_0, window_bounds = array<i64: 2, 4, 256>}, {transform_indices = @transform_1, window_bounds = array<i64: 4, 1>}, {transform_indices = @transform_2, window_bounds = array<i64: 4, 1>}, {transform_indices = @transform_3, window_bounds = array<i64: 2, 4, 256>}]} {
    %c0 = arith.constant 0 : index
    %c0_0 = arith.constant 0 : index
    %c0_1 = arith.constant 0 : index
    %0 = vector.load %arg1[%c0, %c0_0, %c0_1] : memref<2x4x256xf32, #tpu.memory_space<vmem>>, vector<1x4x1xf32>
    %1 = vector.shape_cast %0 : vector<1x4x1xf32> to vector<4x1xf32>
    %cst = arith.constant 0.000000e+00 : f32
    %2 = vector.broadcast %cst : f32 to vector<4x256xf32>
    %c0_i32 = arith.constant 0 : i32
    %3 = arith.index_cast %c0_i32 : i32 to index
    %c0_2 = arith.constant 0 : index
    %c0_3 = arith.constant 0 : index
    %4 = vector.load %arg1[%3, %c0_2, %c0_3] : memref<2x4x256xf32, #tpu.memory_space<vmem>>, vector<1x4x256xf32>
    %5 = vector.shape_cast %4 : vector<1x4x256xf32> to vector<4x256xf32>
    %6 = vector.broadcast %1 : vector<4x1xf32> to vector<4x256xf32>
    %7 = arith.subf %5, %6 : vector<4x256xf32>
    %8 = arith.addf %2, %7 : vector<4x256xf32>
    %9 = arith.mulf %7, %7 : vector<4x256xf32>
    %10 = arith.addf %2, %9 : vector<4x256xf32>
    %c1_i32 = arith.constant 1 : i32
    %11 = arith.index_cast %c1_i32 : i32 to index
    %c0_4 = arith.constant 0 : index
    %c0_5 = arith.constant 0 : index
    %12 = vector.load %arg1[%11, %c0_4, %c0_5] : memref<2x4x256xf32, #tpu.memory_space<vmem>>, vector<1x4x256xf32>
    %13 = vector.shape_cast %12 : vector<1x4x256xf32> to vector<4x256xf32>
    %14 = vector.broadcast %1 : vector<4x1xf32> to vector<4x256xf32>
    %15 = arith.subf %13, %14 : vector<4x256xf32>
    %16 = arith.addf %8, %15 : vector<4x256xf32>
    %17 = arith.mulf %15, %15 : vector<4x256xf32>
    %18 = arith.addf %10, %17 : vector<4x256xf32>
    %c2_i32 = arith.constant 2 : i32
    %cst_6 = arith.constant dense<0.000000e+00> : vector<4xf32>
    %19 = vector.multi_reduction <add>, %16, %cst_6 [1] : vector<4x256xf32> to vector<4xf32>
    %20 = vector.shape_cast %19 : vector<4xf32> to vector<4x1xf32>
    %cst_7 = arith.constant dense<0.000000e+00> : vector<4xf32>
    %21 = vector.multi_reduction <add>, %18, %cst_7 [1] : vector<4x256xf32> to vector<4xf32>
    %22 = vector.shape_cast %21 : vector<4xf32> to vector<4x1xf32>
    %cst_8 = arith.constant 5.120000e+02 : f32
    %23 = vector.broadcast %cst_8 : f32 to vector<4x1xf32>
    %24 = arith.divf %20, %23 : vector<4x1xf32>
    %25 = arith.addf %1, %24 : vector<4x1xf32>
    %26 = arith.mulf %20, %20 : vector<4x1xf32>
    %cst_9 = arith.constant 5.120000e+02 : f32
    %27 = vector.broadcast %cst_9 : f32 to vector<4x1xf32>
    %28 = arith.divf %26, %27 : vector<4x1xf32>
    %29 = arith.subf %22, %28 : vector<4x1xf32>
    %cst_10 = arith.constant 5.110000e+02 : f32
    %30 = vector.broadcast %cst_10 : f32 to vector<4x1xf32>
    %31 = arith.divf %29, %30 : vector<4x1xf32>
    %32 = math.rsqrt %31 : vector<4x1xf32>
    %c0_11 = arith.constant 0 : index
    %c0_12 = arith.constant 0 : index
    %33 = vector.load %arg2[%c0_11, %c0_12] : memref<4x1xf32, #tpu.memory_space<vmem>>, vector<4x1xf32>
    %c0_13 = arith.constant 0 : index
    %c0_14 = arith.constant 0 : index
    %34 = vector.load %arg3[%c0_13, %c0_14] : memref<4x1xf32, #tpu.memory_space<vmem>>, vector<4x1xf32>
    %35 = arith.mulf %33, %32 : vector<4x1xf32>
    %36 = arith.mulf %25, %35 : vector<4x1xf32>
    %37 = arith.subf %34, %36 : vector<4x1xf32>
    %c0_i32_15 = arith.constant 0 : i32
    %38 = arith.index_cast %c0_i32_15 : i32 to index
    %c0_16 = arith.constant 0 : index
    %c0_17 = arith.constant 0 : index
    %39 = vector.load %arg1[%38, %c0_16, %c0_17] : memref<2x4x256xf32, #tpu.memory_space<vmem>>, vector<1x4x256xf32>
    %40 = vector.shape_cast %39 : vector<1x4x256xf32> to vector<4x256xf32>
    %41 = vector.broadcast %35 : vector<4x1xf32> to vector<4x256xf32>
    %42 = arith.mulf %40, %41 : vector<4x256xf32>
    %43 = vector.broadcast %37 : vector<4x1xf32> to vector<4x256xf32>
    %44 = arith.addf %42, %43 : vector<4x256xf32>
    %45 = arith.index_cast %c0_i32_15 : i32 to index
    %c0_18 = arith.constant 0 : index
    %c0_19 = arith.constant 0 : index
    %46 = vector.load %arg4[%45, %c0_18, %c0_19] : memref<2x4x256xf32, #tpu.memory_space<vmem>>, vector<1x4x256xf32>
    %47 = vector.shape_cast %46 : vector<1x4x256xf32> to vector<4x256xf32>
    %48 = vector.shape_cast %44 : vector<4x256xf32> to vector<1x4x256xf32>
    tpu.vector_store %arg4[%45, %c0_18, %c0_19], %48 {strides = array<i32>} : memref<2x4x256xf32, #tpu.memory_space<vmem>>, vector<1x4x256xf32>,
    %c1_i32_20 = arith.constant 1 : i32
    %49 = arith.index_cast %c1_i32_20 : i32 to index
    %c0_21 = arith.constant 0 : index
    %c0_22 = arith.constant 0 : index
    %50 = vector.load %arg1[%49, %c0_21, %c0_22] : memref<2x4x256xf32, #tpu.memory_space<vmem>>, vector<1x4x256xf32>
    %51 = vector.shape_cast %50 : vector<1x4x256xf32> to vector<4x256xf32>
    %52 = vector.broadcast %35 : vector<4x1xf32> to vector<4x256xf32>
    %53 = arith.mulf %51, %52 : vector<4x256xf32>
    %54 = vector.broadcast %37 : vector<4x1xf32> to vector<4x256xf32>
    %55 = arith.addf %53, %54 : vector<4x256xf32>
    %56 = arith.index_cast %c1_i32_20 : i32 to index
    %c0_23 = arith.constant 0 : index
    %c0_24 = arith.constant 0 : index
    %57 = vector.load %arg4[%56, %c0_23, %c0_24] : memref<2x4x256xf32, #tpu.memory_space<vmem>>, vector<1x4x256xf32>
    %58 = vector.shape_cast %57 : vector<1x4x256xf32> to vector<4x256xf32>
    %59 = vector.shape_cast %55 : vector<4x256xf32> to vector<1x4x256xf32>
    tpu.vector_store %arg4[%56, %c0_23, %c0_24], %59 {strides = array<i32>} : memref<2x4x256xf32, #tpu.memory_space<vmem>>, vector<1x4x256xf32>,
    %c2_i32_25 = arith.constant 2 : i32
    return
  }
  func.func @transform_0(%arg0: i32) -> (i32, i32, i32) {
    %c0_i32 = arith.constant 0 : i32
    %c0_i32_0 = arith.constant 0 : i32
    %c0_i32_1 = arith.constant 0 : i32
    return %c0_i32, %arg0, %c0_i32_0 : i32, i32, i32
  }
  func.func @transform_1(%arg0: i32) -> (i32, i32) {
    %c0_i32 = arith.constant 0 : i32
    %c0_i32_0 = arith.constant 0 : i32
    return %arg0, %c0_i32 : i32, i32
  }
  func.func @transform_2(%arg0: i32) -> (i32, i32) {
    %c0_i32 = arith.constant 0 : i32
    %c0_i32_0 = arith.constant 0 : i32
    return %arg0, %c0_i32 : i32, i32
  }
  func.func @transform_3(%arg0: i32) -> (i32, i32, i32) {
    %c0_i32 = arith.constant 0 : i32
    %c0_i32_0 = arith.constant 0 : i32
    %c0_i32_1 = arith.constant 0 : i32
    return %c0_i32, %arg0, %c0_i32_0 : i32, i32, i32
  }
}

</mosaic_0001>

<llo_original>
// kernel: tpu_custom_call.1
$region0: #{tpu_custom_call.1}
  #allocation0 [shape = 'u32[]', space=smem, size = 0x4, offset = 0x4, fixed_abs, tag = 'smem constant byte address 0x4 - core index']
  #allocation1 [shape = 'u32[144,128]{1,0:T(1,128)}', space=vmem, size = 0x12000, scoped, tag = 'internal scratch']
  %s0 = inlined_call_operand.hbm [shape: f32[2,4,256], index: 0, kind: input, shape index: {}]
  %s1 = inlined_call_operand.vmem [shape: f32[4,1], index: 1, kind: input, shape index: {}]
  %s2 = inlined_call_operand.vmem [shape: f32[4,1], index: 2, kind: input, shape index: {}]
  %s3 = inlined_call_operand.hbm [shape: f32[2,4,256], index: 3, kind: output, shape index: {}]
  %s4 = sld [smem:[#allocation0]]
  $region26: #{tpu_custom_call.1} parent=0
    _
  %s6 = ssub.s32 1, %s4
  %s7 = scalar_select 0, %s6, %s4
  $region1: #{tpu_custom_call.1} parent=0
    #allocation2 [shape = 'u8[8192]{0}', space=vmem, size = 0x2000, scoped, tag = 'input window, operand 0, single buffered']
    #allocation3 [shape = 's32[1]{0}', space=sflag, size = 0x4, scoped, tag = 'scoped memory for tpu_custom_call.1']
    #allocation4 [shape = 's32[1]{0}', space=sflag, size = 0x4, scoped, tag = 'scoped memory for tpu_custom_call.1']
    #allocation5 [shape = 'u8[8192]{0}', space=vmem, size = 0x2000, scoped, tag = 'output window, operand 0, single buffered']
    %8 = vsyncpa [#allocation3], 0
    %9 = vsyncpa [#allocation4], 0
    // Predicated region
    $region2: #{tpu_custom_call.1} parent=1 // pred_check
      _
    $region3: #{tpu_custom_call.1} parent=1 // pred_check_branch
      %11 = sbr.rel (0) target = $region5
    $region4: #{tpu_custom_call.1} parent=1 // pred_region
      %s13 = ssub.s32 256, 256
      %14 = vsyncadd [#allocation3], %s13
      %s15 = sshll.u32 [#allocation2], 4
      %s16 = int_to_ptr.vmem [resolvable:$true] %s15
      %21 = dma.hbm_to_vmem [thread:$0]  %s0, 256, %s16, [#allocation3], 128, 128, 8
    $region5: #{tpu_custom_call.1} parent=1 // pred_fallthru
      _
    // Predicated region
    $region6: #{tpu_custom_call.1} parent=1 // pred_check
      _
    $region7: #{tpu_custom_call.1} parent=1 // pred_check_branch
      %23 = sbr.rel (0) target = $region9
    $region8: #{tpu_custom_call.1} parent=1 // pred_region
      _
    $region9: #{tpu_custom_call.1} parent=1 // pred_fallthru
      _
    // Predicated region
    $region10: #{tpu_custom_call.1} parent=1 // pred_check
      _
    $region11: #{tpu_custom_call.1} parent=1 // pred_check_branch
      %25 = sbr.rel (0) target = $region13
    $region12: #{tpu_custom_call.1} parent=1 // pred_region
      _
    $region13: #{tpu_custom_call.1} parent=1 // pred_fallthru
      _
    // Predicated region
    $region14: #{tpu_custom_call.1} parent=1 // pred_check
      _
    $region15: #{tpu_custom_call.1} parent=1 // pred_check_branch
      %27 = sbr.rel (0) target = $region17
    $region16: #{tpu_custom_call.1} parent=1 // pred_region
      %28 = dma.done [#allocation3], 256
    $region17: #{tpu_custom_call.1} parent=1 // pred_fallthru
      _
    %v29 = vld [vmem:[#allocation2] sm:$0xf]
    %v30 = vld [vmem:[#allocation2] sm:$0xff]
    %32 = vset.pattern.permute.xlu0 0
    %33 = vperm.xlu0 %32, %v29
    %v34 = vpop.permute.xlu0 %33
    %v37 = vunpack.c.l.s4 839922192
    %v38 = vunpack.c.0.s8 %v37
    %v39 = vlaneseq
    %v40 = vshrl.u32 %v39, 7
    %v41 = vsub.s32 %v38, %v40
    %v42 = vrot.slane %v34, %v41
    %v43 = vsub.f32 %v30, %v42
    %v44 = vadd.f32 %v43, 0.0
    %v45 = vmul.f32 %v43, %v43
    %v46 = vadd.f32 %v45, 0.0
    %s47 = scalar_lea.vmem [#allocation2], 8
    %v48 = vld [vmem:[%s47] sm:$0xff]
    %v49 = vsub.f32 %v48, %v42
    %v50 = vadd.f32 %v44, %v49
    %v51 = vmul.f32 %v49, %v49
    %v52 = vadd.f32 %v46, %v51
    %v54 = vcombine.high %v50, %v50
    %vm56 = vcmask 1043456
    %v57 = vsel %vm56, %v50, 0.0
    %v58 = vsel %vm56, %v54, 0.0
    %v59 = vadd.f32 %v57, %v58
    %60 = vadd.xlane.f32.xlu0 %v59
    %v61 = vpop.xlane.xlu0 %60
    %v63 = vcombine.high %v52, %v52
    %v65 = vsel %vm56, %v52, 0.0
    %v66 = vsel %vm56, %v63, 0.0
    %v67 = vadd.f32 %v65, %v66
    %68 = vadd.xlane.f32.xlu0 %v67
    %v69 = vpop.xlane.xlu0 %68
    %v70 = vrcp.pop 512.0
    %v71 = vmul.f32 %v61, %v70
    %v72 = vadd.f32 %v29, %v71
    %v73 = vmul.f32 %v61, %v61
    %v74 = vmul.f32 %v73, %v70
    %v75 = vsub.f32 %v69, %v74
    %v76 = vrcp.pop 511.0
    %v77 = vmul.f32 %v75, %v76
    %v78 = vrsqrt.pop %v77
    %v79 = vld [vmem:[%s1] sm:$0xf]
    %v80 = vld [vmem:[%s2] sm:$0xf]
    %v81 = vmul.f32 %v79, %v78
    %v82 = vmul.f32 %v72, %v81
    %v83 = vsub.f32 %v80, %v82
    %85 = vset.pattern.permute.xlu0 0
    %86 = vperm.xlu0 %85, %v81
    %v87 = vpop.permute.xlu0 %86
    %v89 = vunpack.c.l.s4 839922192
    %v90 = vunpack.c.0.s8 %v89
    %v91 = vlaneseq
    %v92 = vshrl.u32 %v91, 7
    %v93 = vsub.s32 %v90, %v92
    %v94 = vrot.slane %v87, %v93
    %v96 = vmul.f32 %v30, %v94
    %98 = vset.pattern.permute.xlu0 0
    %99 = vperm.xlu0 %98, %v83
    %v100 = vpop.permute.xlu0 %99
    %v102 = vunpack.c.l.s4 839922192
    %v103 = vunpack.c.0.s8 %v102
    %v104 = vlaneseq
    %v105 = vshrl.u32 %v104, 7
    %v106 = vsub.s32 %v103, %v105
    %v107 = vrot.slane %v100, %v106
    %v109 = vadd.f32 %v96, %v107
    %110 = vst [vmem:[#allocation5] sm:$0xff] %v109
    %v111 = vld [vmem:[%s47] sm:$0xff]
    %v112 = vmul.f32 %v111, %v94
    %v113 = vadd.f32 %v112, %v107
    %s114 = scalar_lea.vmem [#allocation5], 8
    %115 = vst [vmem:[%s114] sm:$0xff] %v113
    // Predicated region
    $region18: #{tpu_custom_call.1} parent=1 // pred_check
      _
    $region19: #{tpu_custom_call.1} parent=1 // pred_check_branch
      %117 = sbr.rel (0) target = $region21
    $region20: #{tpu_custom_call.1} parent=1 // pred_region
      %s119 = ssub.s32 256, 256
      %120 = vsyncadd [#allocation4], %s119
      %s121 = sshll.u32 [#allocation5], 4
      %s122 = int_to_ptr.vmem [resolvable:$true] %s121
      %127 = dma.vmem_to_hbm [thread:$0]  %s122, 256, %s3, [#allocation4], 128, 128, 8
    $region21: #{tpu_custom_call.1} parent=1 // pred_fallthru
      _
    // Predicated region
    $region22: #{tpu_custom_call.1} parent=1 // pred_check
      _
    $region23: #{tpu_custom_call.1} parent=1 // pred_check_branch
      %129 = sbr.rel (0) target = $region25
    $region24: #{tpu_custom_call.1} parent=1 // pred_region
      %130 = dma.done [#allocation4], 256
    $region25: #{tpu_custom_call.1} parent=1 // pred_fallthru
      _
    %131 = vsyncpa [#allocation3], 1
    %132 = vsyncpa [#allocation4], 1

</llo_original>
